<compile_context>
chip_gen: v6e
topology: v6e:2x2x1
jax: 0.10.0
libtpu: 0.0.40
codegen_flags: <defaults>
</compile_context>

<pallas_src>
import functools

import jax
import jax.numpy as jnp
from jax.experimental import pallas as pl
from jax.experimental.pallas import tpu as pltpu


def _round_up(x, m):
    return ((x + m - 1) // m) * m


def _ce_tile_kernel(logits_ref, target_ref, partial_ref, *, n_total, tm):
    """Per-tile cross-entropy partial sum.

    logits_ref : (TM, C)      input dtype (f32 or bf16)
    target_ref : (TM, 1)      int32 class indices (padded rows hold -1)
    partial_ref: (1, 1, 128)  f32, per-tile loss sum broadcast across lanes
    """
    pid = pl.program_id(0)

    x = logits_ref[...]                                    # (TM, C) input dtype
    tgt = target_ref[...]                                  # (TM, 1) int32

    # Numerically stable log-sum-exp along the class (lane) axis.
    # Max/subtract stay in the input dtype; upcast to f32 only for exp/log.
    m = jnp.max(x, axis=-1, keepdims=True)                 # (TM, 1)
    e = jnp.exp((x - m).astype(jnp.float32))               # (TM, C) f32
    lse = m.astype(jnp.float32) + jnp.log(
        jnp.sum(e, axis=-1, keepdims=True))                # (TM, 1) f32

    # logits[n, target[n]] via masked select (no one-hot multiply).
    col = jax.lax.broadcasted_iota(jnp.int32, x.shape, 1)
    picked = jnp.sum(jnp.where(col == tgt, x, 0), axis=-1,
                     keepdims=True).astype(jnp.float32)    # (TM, 1) f32

    # Mask rows that are padding of a partial last tile.
    row = pid * tm + jax.lax.broadcasted_iota(jnp.int32, (tm, 1), 0)
    per_sample = jnp.where(row < n_total, lse - picked, 0.0)

    tile_sum = jnp.sum(per_sample)                         # scalar f32
    partial_ref[...] = jnp.broadcast_to(tile_sum, partial_ref.shape)


def cross_entropy_loss(logits, target, *, tm=None):
    """logits: (N, C) float, target: (N,) int -> scalar f32 mean CE loss."""
    n, c = logits.shape
    itemsize = jnp.dtype(logits.dtype).itemsize

    if tm is None:
        # ~1 MiB logits tile per pipeline buffer, clamped to [8, 512] rows and
        # never more rows than the (8-rounded) batch itself.
        tm = (max(1, (1 << 20) // max(1, c * itemsize)) // 8) * 8
        tm = max(8, min(512, tm))
    tm = min(tm, _round_up(n, 8))

    n_pad = _round_up(n, tm)
    num_tiles = n_pad // tm

    logits_p = logits if n_pad == n else jnp.pad(
        logits, ((0, n_pad - n), (0, 0)))
    tgt = target.reshape(n, 1).astype(jnp.int32)
    tgt_p = tgt if n_pad == n else jnp.pad(
        tgt, ((0, n_pad - n), (0, 0)), constant_values=-1)

    # Explicit scoped-VMEM budget: double-buffered logits + (lane-padded)
    # target tiles + output blocks + f32 temporaries + slack.
    vmem_limit = int(
        2 * tm * c * itemsize        # double-buffered logits tiles
        + 2 * tm * 128 * 4           # double-buffered target tiles (lane pad)
        + 2 * 128 * 4                # output tiles
        + 6 * tm * c * 4             # in-kernel f32 temporaries
        + 2 * 1024 * 1024            # slack
    )
    vmem_limit = max(16 * 1024 * 1024, min(48 * 1024 * 1024, vmem_limit))

    partial = pl.pallas_call(
        functools.partial(_ce_tile_kernel, n_total=n, tm=tm),
        out_shape=jax.ShapeDtypeStruct((num_tiles, 1, 128), jnp.float32),
        grid=(num_tiles,),
        in_specs=[
            pl.BlockSpec((tm, c), lambda i: (i, 0)),
            pl.BlockSpec((tm, 1), lambda i: (i, 0)),
        ],
        out_specs=pl.BlockSpec((1, 1, 128), lambda i: (i, 0, 0)),
        compiler_params=pltpu.CompilerParams(
            dimension_semantics=("parallel",),
            vmem_limit_bytes=vmem_limit,
        ),
        cost_estimate=pl.CostEstimate(
            flops=6 * n * c,
            transcendentals=n * c,
            bytes_accessed=n * c * itemsize + n * 4 + num_tiles * 128 * 4,
        ),
    )(logits_p, tgt_p)

    # Final mean over the TRUE batch size (padded rows were masked in-kernel).
    return jnp.sum(partial[:, 0, 0]) / jnp.float32(n)


class CrossEntropyWrapper:
    """JAX/Pallas port of solver.loss.CrossEntropyWrapper (forward only)."""

    def __init__(self, **kwargs):
        pass

    def forward(self, output, target):
        loss_cal = 0
        loss_nll = cross_entropy_loss(output, target)
        loss = loss_nll
        return (dict(loss=loss), loss_cal, loss_nll)

    __call__ = forward

    def reset(self):
        pass


if __name__ == "__main__":
    key = jax.random.PRNGKey(0)
    k1, k2 = jax.random.split(key)

    N, C = 20, 32  # small batch of logits over C classes
    logits = jax.random.normal(k1, (N, C), dtype=jnp.float32)
    target = jax.random.randint(k2, (N,), 0, C, dtype=jnp.int32)

    # pure-JAX reference
    ref = -jnp.mean(
        jnp.take_along_axis(
            jax.nn.log_softmax(logits, axis=-1), target[:, None], axis=-1
        )
    )

    wrapper = CrossEntropyWrapper()
    out_dict, loss_cal, loss_nll = wrapper(logits, target)
    jax.block_until_ready(out_dict["loss"])
    assert jnp.allclose(out_dict["loss"], ref, atol=1e-5, rtol=1e-5)
    assert jnp.allclose(loss_nll, ref, atol=1e-5, rtol=1e-5)
    assert loss_cal == 0

    # Exercise the multi-tile path with a partial last tile (3 tiles of 8 rows
    # covering N=20, padded rows masked inside the kernel).
    loss_tiled = cross_entropy_loss(logits, target, tm=8)
    jax.block_until_ready(loss_tiled)
    assert jnp.allclose(loss_tiled, ref, atol=1e-5, rtol=1e-5)

    print("KERNEL_OK")
</pallas_src>

<mosaic_0001>
module attributes {stable_mosaic.version = 11 : i64} {
  func.func @_ce_tile_kernel(%arg0: i32, %arg1: memref<24x32xf32, #tpu.memory_space<vmem>>, %arg2: memref<24x1xi32, #tpu.memory_space<vmem>>, %arg3: memref<1x1x128xf32, #tpu.memory_space<vmem>>) attributes {dimension_semantics = [#tpu.dimension_semantics<parallel>], iteration_bounds = array<i64: 1>, scalar_prefetch = 0 : i64, scratch_operands = 0 : i64, tpu.core_type = #tpu.core_type<tc>, window_params = [{transform_indices = @transform_0, window_bounds = array<i64: 24, 32>}, {transform_indices = @transform_1, window_bounds = array<i64: 24, 1>}, {transform_indices = @transform_2, window_bounds = array<i64: 1, 1, 128>}]} {
    %c0 = arith.constant 0 : index
    %c0_0 = arith.constant 0 : index
    %0 = vector.load %arg1[%c0, %c0_0] : memref<24x32xf32, #tpu.memory_space<vmem>>, vector<24x32xf32>
    %c0_1 = arith.constant 0 : index
    %c0_2 = arith.constant 0 : index
    %1 = vector.load %arg2[%c0_1, %c0_2] : memref<24x1xi32, #tpu.memory_space<vmem>>, vector<24x1xi32>
    %cst = arith.constant dense<0xFF800000> : vector<24xf32>
    %2 = vector.multi_reduction <maximumf>, %0, %cst [1] : vector<24x32xf32> to vector<24xf32>
    %3 = vector.shape_cast %2 : vector<24xf32> to vector<24x1xf32>
    %4 = vector.broadcast %3 : vector<24x1xf32> to vector<24x32xf32>
    %5 = arith.subf %0, %4 : vector<24x32xf32>
    %6 = math.exp %5 : vector<24x32xf32>
    %cst_3 = arith.constant dense<0.000000e+00> : vector<24xf32>
    %7 = vector.multi_reduction <add>, %6, %cst_3 [1] : vector<24x32xf32> to vector<24xf32>
    %8 = vector.shape_cast %7 : vector<24xf32> to vector<24x1xf32>
    %9 = math.log %8 : vector<24x1xf32>
    %10 = arith.addf %3, %9 : vector<24x1xf32>
    %11 = tpu.iota {dimensions = array<i32: 1>} : vector<24x32xi32>
    %12 = vector.broadcast %1 : vector<24x1xi32> to vector<24x32xi32>
    %13 = arith.cmpi eq, %11, %12 : vector<24x32xi32>
    %c0_i32 = arith.constant 0 : i32
    %14 = arith.sitofp %c0_i32 : i32 to f32
    %15 = vector.broadcast %14 : f32 to vector<24x32xf32>
    %16 = arith.select %13, %0, %15 : vector<24x32xi1>, vector<24x32xf32>
    %cst_4 = arith.constant dense<0.000000e+00> : vector<24xf32>
    %17 = vector.multi_reduction <add>, %16, %cst_4 [1] : vector<24x32xf32> to vector<24xf32>
    %18 = vector.shape_cast %17 : vector<24xf32> to vector<24x1xf32>
    %c24_i32 = arith.constant 24 : i32
    %19 = arith.muli %arg0, %c24_i32 : i32
    %20 = tpu.iota {dimensions = array<i32: 0>} : vector<24x1xi32>
    %21 = vector.broadcast %19 : i32 to vector<24x1xi32>
    %22 = arith.addi %21, %20 : vector<24x1xi32>
    %c20_i32 = arith.constant 20 : i32
    %23 = vector.broadcast %c20_i32 : i32 to vector<24x1xi32>
    %24 = arith.cmpi slt, %22, %23 : vector<24x1xi32>
    %25 = arith.subf %10, %18 : vector<24x1xf32>
    %cst_5 = arith.constant 0.000000e+00 : f32
    %26 = vector.broadcast %cst_5 : f32 to vector<24x1xf32>
    %27 = arith.select %24, %25, %26 : vector<24x1xi1>, vector<24x1xf32>
    %28 = vector.shape_cast %27 : vector<24x1xf32> to vector<1x24x1xf32>
    %cst_6 = arith.constant dense<0.000000e+00> : vector<1xf32>
    %29 = vector.multi_reduction <add>, %28, %cst_6 [1, 2] : vector<1x24x1xf32> to vector<1xf32>
    %30 = vector.shape_cast %29 : vector<1xf32> to vector<1x1x1xf32>
    %31 = vector.extract %30[0, 0, 0] : f32 from vector<1x1x1xf32>
    %32 = vector.broadcast %31 : f32 to vector<1x1x128xf32>
    %c0_7 = arith.constant 0 : index
    %c0_8 = arith.constant 0 : index
    %c0_9 = arith.constant 0 : index
    %33 = vector.load %arg3[%c0_7, %c0_8, %c0_9] : memref<1x1x128xf32, #tpu.memory_space<vmem>>, vector<1x1x128xf32>
    tpu.vector_store %arg3[%c0_7, %c0_8, %c0_9], %32 {strides = array<i32>} : memref<1x1x128xf32, #tpu.memory_space<vmem>>, vector<1x1x128xf32>,
    return
  }
  func.func @transform_0(%arg0: i32) -> (i32, i32) {
    %c0_i32 = arith.constant 0 : i32
    %c0_i32_0 = arith.constant 0 : i32
    return %arg0, %c0_i32 : i32, i32
  }
  func.func @transform_1(%arg0: i32) -> (i32, i32) {
    %c0_i32 = arith.constant 0 : i32
    %c0_i32_0 = arith.constant 0 : i32
    return %arg0, %c0_i32 : i32, i32
  }
  func.func @transform_2(%arg0: i32) -> (i32, i32, i32) {
    %c0_i32 = arith.constant 0 : i32
    %c0_i32_0 = arith.constant 0 : i32
    %c0_i32_1 = arith.constant 0 : i32
    return %arg0, %c0_i32, %c0_i32_0 : i32, i32, i32
  }
}

</mosaic_0001>

<llo_original>
// kernel: tpu_custom_call.1
$region0: #{tpu_custom_call.1}
  #allocation0 [shape = 'u32[]', space=smem, size = 0x4, offset = 0x4, fixed_abs, tag = 'smem constant byte address 0x4 - core index']
  #allocation1 [shape = 'u32[144,128]{1,0:T(1,128)}', space=vmem, size = 0x12000, scoped, tag = 'internal scratch']
  %s0 = inlined_call_operand.vmem [shape: f32[24,32], index: 0, kind: input, shape index: {}]
  %s1 = inlined_call_operand.vmem [shape: s32[24,1], index: 1, kind: input, shape index: {}]
  %s2 = inlined_call_operand.hbm [shape: f32[1,1,128], index: 2, kind: output, shape index: {}]
  %s3 = sld [smem:[#allocation0]]
  $region18: #{tpu_custom_call.1} parent=0
    _
  %s5 = ssub.s32 1, %s3
  %s6 = scalar_select 0, %s5, %s3
  $region1: #{tpu_custom_call.1} parent=0
    #allocation2 [shape = 'u8[512]{0}', space=vmem, size = 0x400, scoped, tag = 'output window, operand 0, single buffered']
    #allocation3 [shape = 's32[1]{0}', space=sflag, size = 0x4, scoped, tag = 'scoped memory for tpu_custom_call.1']
    %7 = vsyncpa [#allocation3], 0
    // Predicated region
    $region2: #{tpu_custom_call.1} parent=1 // pred_check
      _
    $region3: #{tpu_custom_call.1} parent=1 // pred_check_branch
      %9 = sbr.rel (0) target = $region5
    $region4: #{tpu_custom_call.1} parent=1 // pred_region
      _
    $region5: #{tpu_custom_call.1} parent=1 // pred_fallthru
      _
    // Predicated region
    $region6: #{tpu_custom_call.1} parent=1 // pred_check
      _
    $region7: #{tpu_custom_call.1} parent=1 // pred_check_branch
      %11 = sbr.rel (0) target = $region9
    $region8: #{tpu_custom_call.1} parent=1 // pred_region
      _
    $region9: #{tpu_custom_call.1} parent=1 // pred_fallthru
      _
    %v12 = vld [vmem:[%s0] sm:$0xff]
    %v13 = vld [vmem:[%s0 + $0x8] sm:$0xff]
    %v14 = vld [vmem:[%s0 + $0x10] sm:$0xff]
    %v15 = vld [vmem:[%s1] sm:$0xff]
    %v16 = vld [vmem:[%s1 + $0x8] sm:$0xff]
    %v17 = vld [vmem:[%s1 + $0x10] sm:$0xff]
    %vm18 = vcmask 261120
    %v19 = vsel %vm18, %v12, -inf
    %20 = vmax.xlane.f32.xlu0 %v19
    %v21 = vpop.xlane.xlu0 %20
    %v22 = vsel %vm18, %v13, -inf
    %23 = vmax.xlane.f32.xlu0 %v22
    %v24 = vpop.xlane.xlu0 %23
    %v25 = vsel %vm18, %v14, -inf
    %26 = vmax.xlane.f32.xlu0 %v25
    %v27 = vpop.xlane.xlu0 %26
    %v28 = vsub.f32 %v12, %v21
    %v29 = vsub.f32 %v13, %v24
    %v30 = vsub.f32 %v14, %v27
    %v31 = vmul.f32 %v28, 1.442695
    %v32 = vpow.pop %v31
    %v33 = vmul.f32 %v29, 1.442695
    %v34 = vpow.pop %v33
    %v35 = vmul.f32 %v30, 1.442695
    %v36 = vpow.pop %v35
    %v37 = vsel %vm18, %v32, 0.0
    %38 = vadd.xlane.f32.xlu0 %v37
    %v39 = vpop.xlane.xlu0 %38
    %v40 = vsel %vm18, %v34, 0.0
    %41 = vadd.xlane.f32.xlu0 %v40
    %v42 = vpop.xlane.xlu0 %41
    %v43 = vsel %vm18, %v36, 0.0
    %44 = vadd.xlane.f32.xlu0 %v43
    %v45 = vpop.xlane.xlu0 %44
    %v46 = vlog2.pop %v39
    %v47 = vmul.f32 %v46, 0.6931472
    %v48 = vlog2.pop %v42
    %v49 = vmul.f32 %v48, 0.6931472
    %v50 = vlog2.pop %v45
    %v51 = vmul.f32 %v50, 0.6931472
    %v52 = vadd.f32 %v21, %v47
    %v53 = vadd.f32 %v24, %v49
    %v54 = vadd.f32 %v27, %v51
    %v55 = vlaneseq
    %v56 = vand.u32 %v55, 127
    %57 = vset.pattern.permute.xlu0 0
    %58 = vperm.xlu0 %57, %v15
    %v59 = vpop.permute.xlu0 %58
    %60 = vset.pattern.permute.xlu0 0
    %61 = vperm.xlu0 %60, %v16
    %v62 = vpop.permute.xlu0 %61
    %63 = vset.pattern.permute.xlu0 0
    %64 = vperm.xlu0 %63, %v17
    %v65 = vpop.permute.xlu0 %64
    %vm66 = vcmp.eq.s32.totalorder %v56, %v59
    %vm67 = vcmp.eq.s32.totalorder %v56, %v62
    %vm68 = vcmp.eq.s32.totalorder %v56, %v65
    %v69 = vsel %vm66, %v12, 0.0
    %v70 = vsel %vm67, %v13, 0.0
    %v71 = vsel %vm68, %v14, 0.0
    %v72 = vsel %vm18, %v69, 0.0
    %73 = vadd.xlane.f32.xlu0 %v72
    %v74 = vpop.xlane.xlu0 %73
    %v75 = vsel %vm18, %v70, 0.0
    %76 = vadd.xlane.f32.xlu0 %v75
    %v77 = vpop.xlane.xlu0 %76
    %v78 = vsel %vm18, %v71, 0.0
    %79 = vadd.xlane.f32.xlu0 %v78
    %v80 = vpop.xlane.xlu0 %79
    %s81 = smul.u32 0, 24
    %v82 = vlaneseq
    %v83 = vshrl.u32 %v82, 7
    %v84 = vadd.s32 %v83, 8
    %v85 = vadd.s32 %v83, 16
    %v86 = vstv %s81
    %v87 = vadd.s32 %v86, %v83
    %v88 = vadd.s32 %v86, %v84
    %v89 = vadd.s32 %v86, %v85
    %vm90 = vcmp.lt.s32.totalorder %v87, 20
    %vm91 = vcmp.lt.s32.totalorder %v88, 20
    %vm92 = vcmp.lt.s32.totalorder %v89, 20
    %v93 = vsub.f32 %v52, %v74
    %v94 = vsub.f32 %v53, %v77
    %v95 = vsub.f32 %v54, %v80
    %v96 = vsel %vm90, %v93, 0.0
    %v97 = vsel %vm91, %v94, 0.0
    %v98 = vsel %vm92, %v95, 0.0
    %vm99 = vcmask 7168
    %v100 = vsel %vm99, %v96, 0.0
    %v101 = vsel %vm99, %v97, 0.0
    %v102 = vadd.f32 %v100, %v101
    %v103 = vsel %vm99, %v98, 0.0
    %v104 = vadd.f32 %v102, %v103
    %105 = vadd.xlane.f32.xlu0 %v104
    %v106 = vpop.xlane.xlu0 %105
    %v107 = vrot.slane %v106, 4
    %v108 = vadd.f32 %v106, %v107
    %v109 = vrot.slane %v108, 2
    %v110 = vadd.f32 %v108, %v109
    %v111 = vrot.slane %v110, 1
    %v112 = vadd.f32 %v110, %v111
    %s113 = vtos %v112
    %v114 = vstv %s113
    %115 = vst [vmem:[#allocation2] sm:$0x1] %v114
    // Predicated region
    $region10: #{tpu_custom_call.1} parent=1 // pred_check
      _
    $region11: #{tpu_custom_call.1} parent=1 // pred_check_branch
      %117 = sbr.rel (0) target = $region13
    $region12: #{tpu_custom_call.1} parent=1 // pred_region
      %s119 = ssub.s32 16, 16
      %120 = vsyncadd [#allocation3], %s119
      %s122 = sshll.u32 [#allocation2], 4
      %s123 = int_to_ptr.vmem [resolvable:$true] %s122
      %125 = dma.vmem_to_hbm [thread:$0]  %s123, 16, %s2, [#allocation3]
    $region13: #{tpu_custom_call.1} parent=1 // pred_fallthru
      _
    // Predicated region
    $region14: #{tpu_custom_call.1} parent=1 // pred_check
      _
    $region15: #{tpu_custom_call.1} parent=1 // pred_check_branch
      %127 = sbr.rel (0) target = $region17
    $region16: #{tpu_custom_call.1} parent=1 // pred_region
      %128 = dma.done [#allocation3], 16
    $region17: #{tpu_custom_call.1} parent=1 // pred_fallthru
      _
    %129 = vsyncpa [#allocation3], 1

</llo_original>
